<compile_context>
chip_gen: v5e
topology: v5e:2x2
jax: 0.10.0
libtpu: 0.0.40
codegen_flags: <defaults>
</compile_context>

<pallas_src>
import functools
import math

import jax
import jax.numpy as jnp
from jax.experimental import pallas as pl
from jax.experimental.pallas import tpu as pltpu

LANE = 128
# Conservative count of full-tile f32 temporaries the kernel body keeps live
# (s, t, t_exp, p_tgt, diff, loss).  Only used to size tiles against the budget.
_TEMP_TILES_F32 = 6
# Budget for pipeline buffers + in-kernel temporaries when picking the tile.
_VMEM_BUDGET_BYTES = 40 * 1024 * 1024
# Explicit scoped-VMEM limit: above v5e's 16 MiB default, below v7x's 64 MiB
# physical per-TC VMEM (leaves headroom for compiler-internal scratch).
_VMEM_LIMIT_BYTES = 48 * 1024 * 1024


def _kl_terms(src_ref, tgt_ref, *, temperature, valid_rows):
    """Shared softmax terms in f32.

    Refs are (1, C, TS, 128); the softmax axis is the leading (non-vreg)
    channel axis, so channel max/sum are VPU ops between vregs (no XLU).

    Returns:
      p_tgt : (1, C, TS, 128)  softmax(target / T) over channels
      diff  : (1, C, TS, 128)  (target - source) / T
      delta : (1, 1, TS, 128)  logsumexp(source/T) - logsumexp(target/T)
    so that the elementwise loss (before T**2) is  p_tgt * (diff + delta).
    """
    s = src_ref[...].astype(jnp.float32)
    t = tgt_ref[...].astype(jnp.float32)

    if valid_rows is not None:
        # Ragged last spatial tile: rows >= valid_rows hold unspecified data
        # (the block overhangs the array).  Zero both inputs there: identical
        # src/tgt softmaxes -> exactly zero KL contribution (and no NaN/Inf).
        ts_rows = s.shape[2]
        row = jax.lax.broadcasted_iota(jnp.int32, (1, 1, ts_rows, s.shape[3]), 2)
        valid = (pl.program_id(1) * ts_rows + row) < valid_rows
        s = jnp.where(valid, s, 0.0)
        t = jnp.where(valid, t, 0.0)

    if temperature != 1.0:
        inv_t = 1.0 / float(temperature)
        s = s * inv_t
        t = t * inv_t

    s_max = jnp.max(s, axis=1, keepdims=True)
    t_max = jnp.max(t, axis=1, keepdims=True)
    lse_s = jnp.log(jnp.sum(jnp.exp(s - s_max), axis=1, keepdims=True)) + s_max
    t_exp = jnp.exp(t - t_max)
    z_t = jnp.sum(t_exp, axis=1, keepdims=True)
    lse_t = jnp.log(z_t) + t_max
    # Exact (non-approx) reciprocal: it is per spatial column (1/C of the
    # elements) so the extra precision is essentially free, and it keeps the
    # elementwise path well inside tight tolerances vs. PyTorch.
    p_tgt = t_exp * pl.reciprocal(z_t, approx=False)

    diff = t - s                      # (1, C, TS, 128)
    delta = lse_s - lse_t             # (1, 1, TS, 128)
    return p_tgt, diff, delta


def _kl_partial_sum_kernel(src_ref, tgt_ref, out_ref, *, temperature,
                           valid_rows, out_sub):
    """Writes one lane-dense (out_sub, 128) partial sum per (batch, tile).

    T**2 is NOT applied here; it is folded into the wrapper-side scalar.
    """
    p_tgt, diff, delta = _kl_terms(src_ref, tgt_ref, temperature=temperature,
                                   valid_rows=valid_rows)
    # sum_C(p_tgt) == 1 (also on masked columns, where delta == 0), so delta
    # is added once per spatial column after the channel reduction.
    kl_sp = jnp.sum(p_tgt * diff, axis=(0, 1)) + delta[0, 0]      # (TS, 128)
    ts_rows = kl_sp.shape[0]
    # Fold sublane groups with tile-aligned reshape + VPU adds (no XLU).
    part = jnp.sum(kl_sp.reshape(ts_rows // out_sub, out_sub, LANE), axis=0)
    out_ref[...] = part.reshape(1, 1, out_sub, LANE)


def _kl_elem_kernel(src_ref, tgt_ref, out_ref, *, temperature, valid_rows,
                    post_scale, lowest_loss_value):
    """reduction='none': elementwise KL with T**2 * scale_factor (and optional
    lowest_loss_value folding) applied in-kernel to avoid extra HBM passes."""
    p_tgt, diff, delta = _kl_terms(src_ref, tgt_ref, temperature=temperature,
                                   valid_rows=valid_rows)
    loss = p_tgt * (diff + delta)
    if post_scale != 1.0:
        loss = loss * post_scale
    if lowest_loss_value is not None:
        llv = float(lowest_loss_value)
        loss = jnp.abs(loss - llv) + llv
    out_ref[...] = loss.astype(out_ref.dtype)


def kldiv_loss(x_src, x_tgt, weight=None, *, scale_factor=1.0, temperature=1.0,
               reduction='mean', lowest_loss_value=None):
    assert x_src.shape == x_tgt.shape, 'invalid shape of x_src or x_tgt'
    assert reduction in ['batchmean', 'mean', 'sum', 'none']
    # TODO(synk): optional elementwise `weight` multiplier not plumbed into the kernel.
    assert weight is None

    orig_shape = x_src.shape
    B, C = int(orig_shape[0]), int(orig_shape[1])
    spatial = int(math.prod(orig_shape[2:]))

    # ---- lane-dense (B, C, S, 128) view --------------------------------------
    S = -(-spatial // LANE)
    lane_ragged = (S * LANE != spatial)
    if lane_ragged:
        # TODO(synk): spatial % 128 != 0 -> one minimal zero-pad pass (rare);
        # the common case below is a free, layout-preserving reshape.
        pad = S * LANE - spatial
        src4 = jnp.pad(x_src.reshape(B, C, spatial),
                       ((0, 0), (0, 0), (0, pad))).reshape(B, C, S, LANE)
        tgt4 = jnp.pad(x_tgt.reshape(B, C, spatial),
                       ((0, 0), (0, 0), (0, pad))).reshape(B, C, S, LANE)
    else:
        src4 = x_src.reshape(B, C, S, LANE)     # contiguous -> no data movement
        tgt4 = x_tgt.reshape(B, C, S, LANE)

    # ---- dtype-aware spatial tiling under a VMEM budget ----------------------
    itemsize = jnp.dtype(x_src.dtype).itemsize
    sublane = max(8, 32 // max(itemsize, 1))     # 8 f32, 16 bf16, 32 int8/fp8
    n_stream_bufs = 6 if reduction == 'none' else 4   # 2 in x 2 bufs (+ out x 2)
    per_row_bytes = (n_stream_bufs * C * LANE * itemsize
                     + _TEMP_TILES_F32 * C * LANE * 4)
    ts_desired = max(sublane,
                     (_VMEM_BUDGET_BYTES // per_row_bytes) // sublane * sublane)

    TS = S if S <= ts_desired else ts_desired
    num_tiles = -(-S // TS)
    if B == 1 and num_tiles < 2 and S > sublane:
        # v7x has 2 TensorCores per chip: keep >= 2 grid steps when possible.
        half = (S + 1) // 2
        TS = max(sublane, ((half + sublane - 1) // sublane) * sublane)
        num_tiles = -(-S // TS)

    needs_mask = (num_tiles * TS != S)           # last tile overhangs the array
    valid_rows = S if needs_mask else None
    out_sub = 8 if TS % 8 == 0 else TS           # lane-dense partial-sum height

    in_spec = pl.BlockSpec((1, C, TS, LANE), lambda b, s: (b, 0, s, 0))
    in_specs = [in_spec, in_spec]

    n_elem = B * C * num_tiles * TS * LANE
    in_bytes = 2 * B * C * S * LANE * itemsize
    transc = 2 * n_elem + 3 * B * num_tiles * TS * LANE
    compiler_params = pltpu.CompilerParams(
        dimension_semantics=("parallel", "parallel"),
        vmem_limit_bytes=_VMEM_LIMIT_BYTES)

    if reduction == 'none':
        out_dtype = x_src.dtype
        post_scale = float(temperature) ** 2 * float(scale_factor)
        loss4 = pl.pallas_call(
            functools.partial(_kl_elem_kernel, temperature=float(temperature),
                              valid_rows=valid_rows, post_scale=post_scale,
                              lowest_loss_value=lowest_loss_value),
            out_shape=jax.ShapeDtypeStruct((B, C, S, LANE), out_dtype),
            grid_spec=pltpu.PrefetchScalarGridSpec(
                num_scalar_prefetch=0,
                grid=(B, num_tiles),
                in_specs=in_specs,
                out_specs=pl.BlockSpec((1, C, TS, LANE),
                                       lambda b, s: (b, 0, s, 0)),
            ),
            compiler_params=compiler_params,
            cost_estimate=pl.CostEstimate(
                flops=int(14 * n_elem), transcendentals=int(transc),
                bytes_accessed=int(in_bytes + B * C * S * LANE * itemsize)),
        )(src4, tgt4)
        if lane_ragged:
            loss = loss4.reshape(B, C, S * LANE)[:, :, :spatial].reshape(orig_shape)
        else:
            loss = loss4.reshape(orig_shape)     # free reshape, no extra pass
        return loss

    partials = pl.pallas_call(
        functools.partial(_kl_partial_sum_kernel, temperature=float(temperature),
                          valid_rows=valid_rows, out_sub=out_sub),
        out_shape=jax.ShapeDtypeStruct((B, num_tiles, out_sub, LANE), jnp.float32),
        grid_spec=pltpu.PrefetchScalarGridSpec(
            num_scalar_prefetch=0,
            grid=(B, num_tiles),
            in_specs=in_specs,
            out_specs=pl.BlockSpec((1, 1, out_sub, LANE),
                                   lambda b, s: (b, s, 0, 0)),
        ),
        compiler_params=compiler_params,
        cost_estimate=pl.CostEstimate(
            flops=int(13 * n_elem), transcendentals=int(transc),
            bytes_accessed=int(in_bytes + B * num_tiles * out_sub * LANE * 4)),
    )(src4, tgt4)

    total = jnp.sum(partials, dtype=jnp.float32)   # tiny tree-reduce in wrapper
    if float(temperature) != 1.0:
        total = total * (float(temperature) ** 2)  # T**2 folded out of the kernel

    if reduction == 'mean':
        loss = total / float(B * C * spatial)
    elif reduction == 'batchmean':
        loss = total / float(B)
    else:  # 'sum'
        loss = total

    loss = loss * scale_factor
    if lowest_loss_value is not None:
        loss = jnp.abs(loss - lowest_loss_value) + lowest_loss_value
    return loss


def _reference(x_src, x_tgt, *, scale_factor=1.0, temperature=1.0,
               reduction='mean', lowest_loss_value=None):
    log_p = jax.nn.log_softmax(x_src.astype(jnp.float32) / temperature, axis=1)
    log_q = jax.nn.log_softmax(x_tgt.astype(jnp.float32) / temperature, axis=1)
    q = jnp.exp(log_q)
    loss = q * (log_q - log_p) * (temperature ** 2)
    if reduction == 'mean':
        loss = loss.mean()
    elif reduction == 'batchmean':
        loss = loss.sum() / x_src.shape[0]
    elif reduction == 'sum':
        loss = loss.sum()
    loss = loss * scale_factor
    if lowest_loss_value is not None:
        loss = jnp.abs(loss - lowest_loss_value) + lowest_loss_value
    return loss


if __name__ == "__main__":
    key = jax.random.PRNGKey(0)
    k1, k2, k3, k4 = jax.random.split(key, 4)
    B, C, H, W = 2, 4, 16, 16
    x_src = jax.random.normal(k1, (B, C, H, W), dtype=jnp.float32)
    x_tgt = jax.random.normal(k2, (B, C, H, W), dtype=jnp.float32)

    # Scalar-reduction paths (default module config is reduction='mean').
    for red in ('mean', 'batchmean', 'sum'):
        out = jax.block_until_ready(kldiv_loss(x_src, x_tgt, reduction=red))
        ref = _reference(x_src, x_tgt, reduction=red)
        assert jnp.allclose(out, ref, rtol=1e-3, atol=1e-5), (red, out, ref)

    # Elementwise path preserves shape and dtype.
    out_none = jax.block_until_ready(kldiv_loss(x_src, x_tgt, reduction='none'))
    ref_none = _reference(x_src, x_tgt, reduction='none')
    assert out_none.shape == (B, C, H, W)
    assert out_none.dtype == x_src.dtype
    assert jnp.allclose(out_none, ref_none, rtol=1e-3, atol=1e-4)

    # Non-default temperature / scale / lowest_loss_value folding.
    out_t = jax.block_until_ready(
        kldiv_loss(x_src, x_tgt, scale_factor=2.0, temperature=2.0,
                   reduction='batchmean', lowest_loss_value=0.1))
    ref_t = _reference(x_src, x_tgt, scale_factor=2.0, temperature=2.0,
                       reduction='batchmean', lowest_loss_value=0.1)
    assert jnp.allclose(out_t, ref_t, rtol=1e-3, atol=1e-5), (out_t, ref_t)

    # Ragged spatial tiling: B == 1 balance split + in-kernel row mask path
    # (S = 2304/128 = 18 rows split into two 16-row tiles, last tile masked).
    x3_src = jax.random.normal(k3, (1, 4, 48, 48), dtype=jnp.float32)
    x3_tgt = jax.random.normal(k4, (1, 4, 48, 48), dtype=jnp.float32)
    out_m = jax.block_until_ready(kldiv_loss(x3_src, x3_tgt, reduction='mean'))
    ref_m = _reference(x3_src, x3_tgt, reduction='mean')
    assert jnp.allclose(out_m, ref_m, rtol=1e-3, atol=1e-5), (out_m, ref_m)
    out_n = jax.block_until_ready(kldiv_loss(x3_src, x3_tgt, reduction='none'))
    ref_n = _reference(x3_src, x3_tgt, reduction='none')
    assert jnp.allclose(out_n, ref_n, rtol=1e-3, atol=1e-4)

    print("KERNEL_OK")
</pallas_src>

<mosaic_0001>
module attributes {stable_mosaic.version = 11 : i64} {
  func.func @_kl_partial_sum_kernel(%arg0: i32, %arg1: i32, %arg2: memref<1x4x2x128xf32, #tpu.memory_space<vmem>>, %arg3: memref<1x4x2x128xf32, #tpu.memory_space<vmem>>, %arg4: memref<1x1x2x128xf32, #tpu.memory_space<vmem>>) attributes {dimension_semantics = [#tpu.dimension_semantics<parallel>, #tpu.dimension_semantics<parallel>], iteration_bounds = array<i64: 2, 1>, scalar_prefetch = 0 : i64, scratch_operands = 0 : i64, tpu.core_type = #tpu.core_type<tc>, window_params = [{transform_indices = @transform_0, window_bounds = array<i64: 1, 4, 2, 128>}, {transform_indices = @transform_1, window_bounds = array<i64: 1, 4, 2, 128>}, {transform_indices = @transform_2, window_bounds = array<i64: 1, 1, 2, 128>}]} {
    %c0 = arith.constant 0 : index
    %c0_0 = arith.constant 0 : index
    %c0_1 = arith.constant 0 : index
    %c0_2 = arith.constant 0 : index
    %0 = vector.load %arg2[%c0, %c0_0, %c0_1, %c0_2] : memref<1x4x2x128xf32, #tpu.memory_space<vmem>>, vector<1x4x2x128xf32>
    %c0_3 = arith.constant 0 : index
    %c0_4 = arith.constant 0 : index
    %c0_5 = arith.constant 0 : index
    %c0_6 = arith.constant 0 : index
    %1 = vector.load %arg3[%c0_3, %c0_4, %c0_5, %c0_6] : memref<1x4x2x128xf32, #tpu.memory_space<vmem>>, vector<1x4x2x128xf32>
    %cst = arith.constant dense<0xFF800000> : vector<1x2x128xf32>
    %2 = vector.multi_reduction <maximumf>, %0, %cst [1] : vector<1x4x2x128xf32> to vector<1x2x128xf32>
    %3 = vector.shape_cast %2 : vector<1x2x128xf32> to vector<1x1x2x128xf32>
    %cst_7 = arith.constant dense<0xFF800000> : vector<1x2x128xf32>
    %4 = vector.multi_reduction <maximumf>, %1, %cst_7 [1] : vector<1x4x2x128xf32> to vector<1x2x128xf32>
    %5 = vector.shape_cast %4 : vector<1x2x128xf32> to vector<1x1x2x128xf32>
    %6 = vector.broadcast %3 : vector<1x1x2x128xf32> to vector<1x4x2x128xf32>
    %7 = arith.subf %0, %6 : vector<1x4x2x128xf32>
    %8 = math.exp %7 : vector<1x4x2x128xf32>
    %cst_8 = arith.constant dense<0.000000e+00> : vector<1x2x128xf32>
    %9 = vector.multi_reduction <add>, %8, %cst_8 [1] : vector<1x4x2x128xf32> to vector<1x2x128xf32>
    %10 = vector.shape_cast %9 : vector<1x2x128xf32> to vector<1x1x2x128xf32>
    %11 = math.log %10 : vector<1x1x2x128xf32>
    %12 = arith.addf %11, %3 : vector<1x1x2x128xf32>
    %13 = vector.broadcast %5 : vector<1x1x2x128xf32> to vector<1x4x2x128xf32>
    %14 = arith.subf %1, %13 : vector<1x4x2x128xf32>
    %15 = math.exp %14 : vector<1x4x2x128xf32>
    %cst_9 = arith.constant dense<0.000000e+00> : vector<1x2x128xf32>
    %16 = vector.multi_reduction <add>, %15, %cst_9 [1] : vector<1x4x2x128xf32> to vector<1x2x128xf32>
    %17 = vector.shape_cast %16 : vector<1x2x128xf32> to vector<1x1x2x128xf32>
    %18 = math.log %17 : vector<1x1x2x128xf32>
    %19 = arith.addf %18, %5 : vector<1x1x2x128xf32>
    %20 = tpu.reciprocal %17 : vector<1x1x2x128xf32> -> vector<1x1x2x128xf32>
    %21 = vector.broadcast %20 : vector<1x1x2x128xf32> to vector<1x4x2x128xf32>
    %22 = arith.mulf %15, %21 : vector<1x4x2x128xf32>
    %23 = arith.subf %1, %0 : vector<1x4x2x128xf32>
    %24 = arith.subf %12, %19 : vector<1x1x2x128xf32>
    %25 = arith.mulf %22, %23 : vector<1x4x2x128xf32>
    %cst_10 = arith.constant dense<0.000000e+00> : vector<2x128xf32>
    %26 = vector.multi_reduction <add>, %25, %cst_10 [0, 1] : vector<1x4x2x128xf32> to vector<2x128xf32>
    %27 = vector.shape_cast %24 : vector<1x1x2x128xf32> to vector<2x128xf32>
    %28 = arith.addf %26, %27 : vector<2x128xf32>
    %29 = vector.shape_cast %28 : vector<2x128xf32> to vector<1x2x128xf32>
    %cst_11 = arith.constant dense<0.000000e+00> : vector<2x128xf32>
    %30 = vector.multi_reduction <add>, %29, %cst_11 [0] : vector<1x2x128xf32> to vector<2x128xf32>
    %31 = vector.shape_cast %30 : vector<2x128xf32> to vector<1x1x2x128xf32>
    %c0_12 = arith.constant 0 : index
    %c0_13 = arith.constant 0 : index
    %c0_14 = arith.constant 0 : index
    %c0_15 = arith.constant 0 : index
    %32 = vector.load %arg4[%c0_12, %c0_13, %c0_14, %c0_15] : memref<1x1x2x128xf32, #tpu.memory_space<vmem>>, vector<1x1x2x128xf32>
    tpu.vector_store %arg4[%c0_12, %c0_13, %c0_14, %c0_15], %31 {strides = array<i32>} : memref<1x1x2x128xf32, #tpu.memory_space<vmem>>, vector<1x1x2x128xf32>,
    return
  }
  func.func @transform_0(%arg0: i32, %arg1: i32) -> (i32, i32, i32, i32) {
    %c0_i32 = arith.constant 0 : i32
    %c0_i32_0 = arith.constant 0 : i32
    %c0_i32_1 = arith.constant 0 : i32
    return %arg0, %c0_i32, %arg1, %c0_i32_0 : i32, i32, i32, i32
  }
  func.func @transform_1(%arg0: i32, %arg1: i32) -> (i32, i32, i32, i32) {
    %c0_i32 = arith.constant 0 : i32
    %c0_i32_0 = arith.constant 0 : i32
    %c0_i32_1 = arith.constant 0 : i32
    return %arg0, %c0_i32, %arg1, %c0_i32_0 : i32, i32, i32, i32
  }
  func.func @transform_2(%arg0: i32, %arg1: i32) -> (i32, i32, i32, i32) {
    %c0_i32 = arith.constant 0 : i32
    %c0_i32_0 = arith.constant 0 : i32
    %c0_i32_1 = arith.constant 0 : i32
    return %arg0, %arg1, %c0_i32, %c0_i32_0 : i32, i32, i32, i32
  }
}

</mosaic_0001>

<llo_original>
// kernel: tpu_custom_call.1
$region0: #{tpu_custom_call.1}
  #allocation0 [shape = 'u32[]', space=smem, size = 0x4, offset = 0x4, fixed_abs, tag = 'smem constant byte address 0x4 - core index']
  #allocation1 [shape = 'u32[72,128]{1,0:T(1,128)}', space=vmem, size = 0x9000, scoped, tag = 'internal scratch']
  %s0 = inlined_call_operand.hbm [shape: f32[2,4,2,128], index: 0, kind: input, shape index: {}]
  %s1 = inlined_call_operand.hbm [shape: f32[2,4,2,128], index: 1, kind: input, shape index: {}]
  %s2 = inlined_call_operand.hbm [shape: f32[2,1,2,128], index: 2, kind: output, shape index: {}]
  %s3 = sld [smem:[#allocation0]]
  $region49: #{tpu_custom_call.1} parent=0
    _
  %s5 = ssub.s32 1, %s3
  %s6 = scalar_select 0, %s5, %s3
  $region1: #{tpu_custom_call.1} parent=0
    #allocation2 [shape = 'u8[8192]{0}', space=vmem, size = 0x2000, scoped, tag = 'input window, operand 0']
    #allocation3 [shape = 's32[2]{0}', space=sflag, size = 0x8, scoped, tag = 'scoped memory for tpu_custom_call.1']
    #allocation4 [shape = 's32[2]{0}', space=sflag, size = 0x8, scoped, tag = 'scoped memory for tpu_custom_call.1']
    #allocation5 [shape = 'u8[8192]{0}', space=vmem, size = 0x2000, scoped, tag = 'input window, operand 1']
    #allocation6 [shape = 's32[2]{0}', space=sflag, size = 0x8, scoped, tag = 'scoped memory for tpu_custom_call.1']
    #allocation7 [shape = 'u8[2048]{0}', space=vmem, size = 0x800, scoped, tag = 'output window, operand 0']
    %7 = vsyncpa [#allocation3], 0
    %s8 = scalar_lea.sflag [#allocation3], 1
    %9 = vsyncpa %s8, 0
    %10 = vsyncpa [#allocation6], 0
    %s11 = scalar_lea.sflag [#allocation6], 1
    %12 = vsyncpa %s11, 0
    %13 = vsyncpa [#allocation4], 0
    %s14 = scalar_lea.sflag [#allocation4], 1
    %15 = vsyncpa %s14, 0
    loop: start=0, step=1, limit=4
    $region2: #{tpu_custom_call.1} parent=1 // loop_pre_header
      _
    $region3: #{tpu_custom_call.1} parent=1 // loop_header
      %s17 = sphi 0, %s21
      %p18 = scmp.ge.s32.totalorder %s17, 4
      %s24 = sphi 0, %s36
      %s25 = sphi 0, %s32
      %s26 = sphi 0, %s24
      %s27 = sphi 0, %s25
      %s28 = sphi 0, %s26
      %s29 = sphi 0, %s27
      %s41 = sphi 0, %s43
      %s44 = sphi 0, %s41
      %s45 = sphi 0, %s44
      %s61 = sphi 0, %s45
      %s69 = sphi 0, %s71
      %s72 = sphi 0, %s69
      %s73 = sphi 0, %s72
      %s89 = sphi 0, %s73
      %s97 = sphi 0, %s99
      %s100 = sphi 0, %s97
      %s101 = sphi 0, %s100
      %s117 = sphi 0, %s101
    $region4: #{tpu_custom_call.1} parent=1 // loop_header_branch
      %20 = sbr.rel (%p18) target = $region8
    $region5: #{tpu_custom_call.1} parent=1 // loop_body
      %s22 = ssub.s32 %s17, 1
      %s23 = ssub.s32 %s17, 2
      %s30 = sadd.s32 1, %s25
      %p31 = scmp.ge.s32.totalorder %s30, 1
      %s32 = scalar_select %p31, 0, %s30
      %s33 = sadd.s32 1, %s24
      %s34 = scalar_select %p31, %s33, %s24
      %p35 = scmp.ge.s32.totalorder %s34, 2
      %s36 = scalar_select %p35, 0, %s34
      %s37 = ssub.s32 %s24, %s36
      %s38 = ssub.s32 %s25, %s32
      %s39 = sor.u32 %s37, %s38
      %p40 = scmp.eq.s32.totalorder %s39, 0
      %s42 = sadd.s32 %s41, 1
      %s43 = scalar_select %p40, %s41, %s42
      %p46 = pneg %p40
      %p47 = scmp.eq.s32.totalorder %s17, 1
      %p48 = por %p46, %p47
      %p49 = scmp.ne.s32.totalorder %s41, %s44
      %p50 = scmp.eq.s32.totalorder %s17, 0
      %p51 = por %p49, %p50
      %p52 = scmp.ne.s32.totalorder %s41, %s44
      %p53 = scmp.eq.s32.totalorder %s22, 1
      %p54 = por %p52, %p53
      %p55 = scmp.ne.s32.totalorder %s44, %s45
      %p56 = scmp.eq.s32.totalorder %s22, 0
      %p57 = por %p55, %p56
      %p58 = scmp.ne.s32.totalorder %s44, %s45
      %p59 = scmp.eq.s32.totalorder %s23, 1
      %p60 = por %p58, %p59
      %p62 = scmp.ne.s32.totalorder %s45, %s61
      %p63 = scmp.eq.s32.totalorder %s23, 0
      %p64 = por %p62, %p63
      %s65 = ssub.s32 %s24, %s36
      %s66 = ssub.s32 %s25, %s32
      %s67 = sor.u32 %s65, %s66
      %p68 = scmp.eq.s32.totalorder %s67, 0
      %s70 = sadd.s32 %s69, 1
      %s71 = scalar_select %p68, %s69, %s70
      %p74 = pneg %p68
      %p75 = scmp.eq.s32.totalorder %s17, 1
      %p76 = por %p74, %p75
      %p77 = scmp.ne.s32.totalorder %s69, %s72
      %p78 = scmp.eq.s32.totalorder %s17, 0
      %p79 = por %p77, %p78
      %p80 = scmp.ne.s32.totalorder %s69, %s72
      %p81 = scmp.eq.s32.totalorder %s22, 1
      %p82 = por %p80, %p81
      %p83 = scmp.ne.s32.totalorder %s72, %s73
      %p84 = scmp.eq.s32.totalorder %s22, 0
      %p85 = por %p83, %p84
      %p86 = scmp.ne.s32.totalorder %s72, %s73
      %p87 = scmp.eq.s32.totalorder %s23, 1
      %p88 = por %p86, %p87
      %p90 = scmp.ne.s32.totalorder %s73, %s89
      %p91 = scmp.eq.s32.totalorder %s23, 0
      %p92 = por %p90, %p91
      %s93 = ssub.s32 %s24, %s36
      %s94 = ssub.s32 %s25, %s32
      %s95 = sor.u32 %s93, %s94
      %p96 = scmp.eq.s32.totalorder %s95, 0
      %s98 = sadd.s32 %s97, 1
      %s99 = scalar_select %p96, %s97, %s98
      %p102 = pneg %p96
      %p103 = scmp.eq.s32.totalorder %s17, 1
      %p104 = por %p102, %p103
      %p105 = scmp.ne.s32.totalorder %s97, %s100
      %p106 = scmp.eq.s32.totalorder %s17, 0
      %p107 = por %p105, %p106
      %p108 = scmp.ne.s32.totalorder %s97, %s100
      %p109 = scmp.eq.s32.totalorder %s22, 1
      %p110 = por %p108, %p109
      %p111 = scmp.ne.s32.totalorder %s100, %s101
      %p112 = scmp.eq.s32.totalorder %s22, 0
      %p113 = por %p111, %p112
      %p114 = scmp.ne.s32.totalorder %s100, %s101
      %p115 = scmp.eq.s32.totalorder %s23, 1
      %p116 = por %p114, %p115
      %p118 = scmp.ne.s32.totalorder %s101, %s117
      %p119 = scmp.eq.s32.totalorder %s23, 0
      %p120 = por %p118, %p119
      %p121 = scmp.le.s32.totalorder 1, %s17
      %p122 = scmp.lt.s32.totalorder %s17, 3
      %p123 = pnand %p121, %p122
      %p124 = pneg %p123
      // Predicated region
      $region9: #{tpu_custom_call.1} parent=5 // pred_check
        _
      $region10: #{tpu_custom_call.1} parent=5 // pred_check_branch
        %126 = sbr.rel (%p123) target = $region12
      $region11: #{tpu_custom_call.1} parent=5 // pred_region
        %s127 = ssub.s32 %s17, 1
      $region12: #{tpu_custom_call.1} parent=5 // pred_fallthru
        _
      %p128 = scmp.lt.s32.totalorder %s17, 2
      // Predicated region
      $region13: #{tpu_custom_call.1} parent=5 // pred_check
        %p129 = pneg %p128
      $region14: #{tpu_custom_call.1} parent=5 // pred_check_branch
        %131 = sbr.rel (%p129) target = $region16
      $region15: #{tpu_custom_call.1} parent=5 // pred_region
        // Predicated region
        $region17: #{tpu_custom_call.1} parent=15 // pred_check
          %p132 = pneg %p51
        $region18: #{tpu_custom_call.1} parent=15 // pred_check_branch
          %134 = sbr.rel (%p132) target = $region20
        $region19: #{tpu_custom_call.1} parent=15 // pred_region
          %s135 = sand.u32 %s41, 1
          %s136 = scalar_lea.sflag [#allocation3], %s135
          %s137 = sand.u32 %s41, 1
          %s138 = smul.addr %s137, 8
          %s139 = scalar_lea.vmem [#allocation2], %s138
          %141 = vsyncadd %s136, 0
          %s142 = smul.addr %s24, 4
          %s143 = sadd.s32 %s25, %s142
          %s144 = smul.addr %s143, 2
          %s145 = scalar_lea.hbm %s0, %s144
          %s146 = sshll.u32 %s145, 4
          %s147 = int_to_ptr.hbm [resolvable:$true] %s146
          %s148 = sshll.u32 %s139, 4
          %s149 = int_to_ptr.vmem [resolvable:$true] %s148
          %154 = dma.hbm_to_vmem [thread:$0]  %s147, 128, %s149, %s136, 32, 32, 2
        $region20: #{tpu_custom_call.1} parent=15 // pred_fallthru
          _
        // Predicated region
        $region21: #{tpu_custom_call.1} parent=15 // pred_check
          %p155 = pneg %p79
        $region22: #{tpu_custom_call.1} parent=15 // pred_check_branch
          %157 = sbr.rel (%p155) target = $region24
        $region23: #{tpu_custom_call.1} parent=15 // pred_region
          %s158 = sand.u32 %s69, 1
          %s159 = scalar_lea.sflag [#allocation6], %s158
          %s160 = sand.u32 %s69, 1
          %s161 = smul.addr %s160, 8
          %s162 = scalar_lea.vmem [#allocation5], %s161
          %164 = vsyncadd %s159, 0
          %s165 = smul.addr %s24, 4
          %s166 = sadd.s32 %s25, %s165
          %s167 = smul.addr %s166, 2
          %s168 = scalar_lea.hbm %s1, %s167
          %s169 = sshll.u32 %s168, 4
          %s170 = int_to_ptr.hbm [resolvable:$true] %s169
          %s171 = sshll.u32 %s162, 4
          %s172 = int_to_ptr.vmem [resolvable:$true] %s171
          %177 = dma.hbm_to_vmem [thread:$0]  %s170, 128, %s172, %s159, 32, 32, 2
        $region24: #{tpu_custom_call.1} parent=15 // pred_fallthru
          _
      $region16: #{tpu_custom_call.1} parent=5 // pred_fallthru
        _
      %p178 = scmp.le.s32.totalorder 1, %s17
      %p179 = scmp.lt.s32.totalorder %s17, 3
      %p180 = pnand %p178, %p179
      %p181 = pneg %p180
      // Predicated region
      $region25: #{tpu_custom_call.1} parent=5 // pred_check
        _
      $region26: #{tpu_custom_call.1} parent=5 // pred_check_branch
        %183 = sbr.rel (%p180) target = $region28
      $region27: #{tpu_custom_call.1} parent=5 // pred_region
        %s184 = ssub.s32 %s17, 1
        %s185 = sand.u32 %s44, 1
        %s186 = scalar_lea.sflag [#allocation3], %s185
        %s187 = sand.u32 %s44, 1
        %s188 = smul.addr %s187, 8
        %s189 = scalar_lea.vmem [#allocation2], %s188
        // Predicated region
        $region29: #{tpu_custom_call.1} parent=27 // pred_check
          %p190 = pneg %p57
        $region30: #{tpu_custom_call.1} parent=27 // pred_check_branch
          %192 = sbr.rel (%p190) target = $region32
        $region31: #{tpu_custom_call.1} parent=27 // pred_region
          %194 = dma.done %s186, 128
        $region32: #{tpu_custom_call.1} parent=27 // pred_fallthru
          _
        %s195 = sand.u32 %s72, 1
        %s196 = scalar_lea.sflag [#allocation6], %s195
        %s197 = sand.u32 %s72, 1
        %s198 = smul.addr %s197, 8
        %s199 = scalar_lea.vmem [#allocation5], %s198
        // Predicated region
        $region33: #{tpu_custom_call.1} parent=27 // pred_check
          %p200 = pneg %p85
        $region34: #{tpu_custom_call.1} parent=27 // pred_check_branch
          %202 = sbr.rel (%p200) target = $region36
        $region35: #{tpu_custom_call.1} parent=27 // pred_region
          %204 = dma.done %s196, 128
        $region36: #{tpu_custom_call.1} parent=27 // pred_fallthru
          _
        %s205 = sand.u32 %s44, 1
        %s206 = scalar_lea.sflag [#allocation3], %s205
        %s207 = sand.u32 %s44, 1
        %s208 = smul.addr %s207, 8
        %s209 = scalar_lea.vmem [#allocation2], %s208
        %p210 = pneg %p57
        %p211 = pneg %p54
        %s212 = sand.u32 %s72, 1
        %s213 = scalar_lea.sflag [#allocation6], %s212
        %s214 = sand.u32 %s72, 1
        %s215 = smul.addr %s214, 8
        %s216 = scalar_lea.vmem [#allocation5], %s215
        %p217 = pneg %p85
        %p218 = pneg %p82
        %p219 = pneg %p113
        %p220 = pneg %p110
        %s221 = sand.u32 %s100, 1
        %s222 = scalar_lea.sflag [#allocation4], %s221
        %s223 = sand.u32 %s100, 1
        %s224 = smul.addr %s223, 2
        %s225 = scalar_lea.vmem [#allocation7], %s224
        %v226 = vld [vmem:[%s189] sm:$0x3]
        %v227 = vld [vmem:[%s189 + $0x2] sm:$0x3]
        %v228 = vld [vmem:[%s189 + $0x4] sm:$0x3]
        %v229 = vld [vmem:[%s189 + $0x6] sm:$0x3]
        %v230 = vld [vmem:[%s199] sm:$0x3]
        %v231 = vld [vmem:[%s199 + $0x2] sm:$0x3]
        %v232 = vld [vmem:[%s199 + $0x4] sm:$0x3]
        %v233 = vld [vmem:[%s199 + $0x6] sm:$0x3]
        %vm234 = vcmask 1041408
        %v235 = vsel %vm234, %v226, -inf
        %v236 = vsel %vm234, %v227, -inf
        %v237 = vsel %vm234, %v228, -inf
        %v238 = vsel %vm234, %v229, -inf
        %v239 = vmax.f32 %v235, %v236
        %v240 = vmax.f32 %v237, %v238
        %v241 = vmax.f32 %v239, %v240
        %v242 = vsel %vm234, %v230, -inf
        %v243 = vsel %vm234, %v231, -inf
        %v244 = vsel %vm234, %v232, -inf
        %v245 = vsel %vm234, %v233, -inf
        %v246 = vmax.f32 %v242, %v243
        %v247 = vmax.f32 %v244, %v245
        %v248 = vmax.f32 %v246, %v247
        %v249 = vsub.f32 %v226, %v241
        %v250 = vsub.f32 %v227, %v241
        %v251 = vsub.f32 %v228, %v241
        %v252 = vsub.f32 %v229, %v241
        %v253 = vmul.f32 %v249, 1.442695
        %v254 = vpow.pop %v253
        %v255 = vmul.f32 %v250, 1.442695
        %v256 = vpow.pop %v255
        %v257 = vmul.f32 %v251, 1.442695
        %v258 = vpow.pop %v257
        %v259 = vmul.f32 %v252, 1.442695
        %v260 = vpow.pop %v259
        %v261 = vsel %vm234, %v254, 0.0
        %v262 = vsel %vm234, %v256, 0.0
        %v263 = vadd.f32 %v261, %v262
        %v264 = vsel %vm234, %v258, 0.0
        %v265 = vadd.f32 %v263, %v264
        %v266 = vsel %vm234, %v260, 0.0
        %v267 = vadd.f32 %v265, %v266
        %v268 = vlog2.pop %v267
        %v269 = vmul.f32 %v268, 0.6931472
        %v270 = vadd.f32 %v269, %v241
        %v271 = vsub.f32 %v230, %v248
        %v272 = vsub.f32 %v231, %v248
        %v273 = vsub.f32 %v232, %v248
        %v274 = vsub.f32 %v233, %v248
        %v275 = vmul.f32 %v271, 1.442695
        %v276 = vpow.pop %v275
        %v277 = vmul.f32 %v272, 1.442695
        %v278 = vpow.pop %v277
        %v279 = vmul.f32 %v273, 1.442695
        %v280 = vpow.pop %v279
        %v281 = vmul.f32 %v274, 1.442695
        %v282 = vpow.pop %v281
        %v283 = vsel %vm234, %v276, 0.0
        %v284 = vsel %vm234, %v278, 0.0
        %v285 = vadd.f32 %v283, %v284
        %v286 = vsel %vm234, %v280, 0.0
        %v287 = vadd.f32 %v285, %v286
        %v288 = vsel %vm234, %v282, 0.0
        %v289 = vadd.f32 %v287, %v288
        %v290 = vlog2.pop %v289
        %v291 = vmul.f32 %v290, 0.6931472
        %v292 = vadd.f32 %v291, %v248
        %v293 = vrcp.pop %v289
        %v294 = vmul.f32 %v289, %v293
        %v295 = vsub.f32 1.0, %v294
        %v296 = vmul.f32 %v293, %v295
        %v297 = vadd.f32 %v293, %v296
        %vm298 = vweird.f32 %v289
        %vm299 = vweird.f32 %v293
        %vm300 = vmor %vm298, %vm299
        %v301 = vsel %vm300, %v293, %v297
        %v302 = vand.u32 2147483647, %v289
        %vm303 = vcmp.eq.f32.partialorder %v302, 8.507059e+37
        %v304 = vand.u32 %v289, 2147483648
        %v305 = vor.u32 1.1754944e-38, %v304
        %v306 = vsel %vm303, %v305, %v301
        %v307 = vmul.f32 %v276, %v306
        %v308 = vmul.f32 %v278, %v306
        %v309 = vmul.f32 %v280, %v306
        %v310 = vmul.f32 %v282, %v306
        %v311 = vsub.f32 %v230, %v226
        %v312 = vsub.f32 %v231, %v227
        %v313 = vsub.f32 %v232, %v228
        %v314 = vsub.f32 %v233, %v229
        %v315 = vsub.f32 %v270, %v292
        %v316 = vmul.f32 %v307, %v311
        %v317 = vmul.f32 %v308, %v312
        %v318 = vmul.f32 %v309, %v313
        %v319 = vmul.f32 %v310, %v314
        %v320 = vsel %vm234, %v316, 0.0
        %v321 = vsel %vm234, %v317, 0.0
        %v322 = vadd.f32 %v320, %v321
        %v323 = vsel %vm234, %v318, 0.0
        %v324 = vadd.f32 %v322, %v323
        %v325 = vsel %vm234, %v319, 0.0
        %v326 = vadd.f32 %v324, %v325
        %v327 = vadd.f32 %v326, %v315
        %v328 = vadd.f32 %v327, 0.0
        %329 = vst [vmem:[%s225] sm:$0x3] %v328
        %s330 = sand.u32 %s100, 1
        %s331 = scalar_lea.sflag [#allocation4], %s330
        %s332 = sand.u32 %s100, 1
        %s333 = smul.addr %s332, 2
        %s334 = scalar_lea.vmem [#allocation7], %s333
        // Predicated region
        $region37: #{tpu_custom_call.1} parent=27 // pred_check
          %p335 = pneg %p110
        $region38: #{tpu_custom_call.1} parent=27 // pred_check_branch
          %337 = sbr.rel (%p335) target = $region40
        $region39: #{tpu_custom_call.1} parent=27 // pred_region
          %339 = vsyncadd %s331, 0
          %s340 = sadd.s32 %s27, %s26
          %s341 = smul.addr %s340, 2
          %s342 = scalar_lea.hbm %s2, %s341
          %s344 = sshll.u32 %s334, 4
          %s345 = int_to_ptr.vmem [resolvable:$true] %s344
          %s346 = sshll.u32 %s342, 4
          %s347 = int_to_ptr.hbm [resolvable:$true] %s346
          %349 = dma.vmem_to_hbm [thread:$0]  %s345, 32, %s347, %s331
        $region40: #{tpu_custom_call.1} parent=27 // pred_fallthru
          _
      $region28: #{tpu_custom_call.1} parent=5 // pred_fallthru
        _
      %p350 = scmp.le.s32.totalorder 2, %s17
      // Predicated region
      $region41: #{tpu_custom_call.1} parent=5 // pred_check
        %p351 = pneg %p350
      $region42: #{tpu_custom_call.1} parent=5 // pred_check_branch
        %353 = sbr.rel (%p351) target = $region44
      $region43: #{tpu_custom_call.1} parent=5 // pred_region
        %s354 = ssub.s32 %s17, 2
        // Predicated region
        $region45: #{tpu_custom_call.1} parent=43 // pred_check
          %p355 = pneg %p116
        $region46: #{tpu_custom_call.1} parent=43 // pred_check_branch
          %357 = sbr.rel (%p355) target = $region48
        $region47: #{tpu_custom_call.1} parent=43 // pred_region
          %s358 = sand.u32 %s101, 1
          %s359 = scalar_lea.sflag [#allocation4], %s358
          %s360 = sand.u32 %s101, 1
          %s361 = smul.addr %s360, 2
          %s362 = scalar_lea.vmem [#allocation7], %s361
          %364 = dma.done %s359, 32
        $region48: #{tpu_custom_call.1} parent=43 // pred_fallthru
          _
      $region44: #{tpu_custom_call.1} parent=5 // pred_fallthru
        _
    $region6: #{tpu_custom_call.1} parent=1 // loop_footer
      %s21 = sadd.s32 1, %s17
    $region7: #{tpu_custom_call.1} parent=1 // loop_footer_branch
      %16 = sbr.rel target = $region3
    $region8: #{tpu_custom_call.1} parent=1 // loop_exit
      _
    %365 = vsyncpa [#allocation3], 1
    %s366 = scalar_lea.sflag [#allocation3], 1
    %367 = vsyncpa %s366, 1
    %368 = vsyncpa [#allocation6], 1
    %s369 = scalar_lea.sflag [#allocation6], 1
    %370 = vsyncpa %s369, 1
    %371 = vsyncpa [#allocation4], 1
    %s372 = scalar_lea.sflag [#allocation4], 1
    %373 = vsyncpa %s372, 1

</llo_original>
